<compile_context>
chip_gen: v6e
topology: v6e:2x2x1
jax: 0.10.0
libtpu: 0.0.40
codegen_flags: <defaults>
</compile_context>

<pallas_src>
import functools
import math

import jax
import jax.numpy as jnp
from jax.experimental import pallas as pl
from jax.experimental.pallas import tpu as pltpu


def _round_up(x, m):
    return ((x + m - 1) // m) * m


# ----------------------------------------------------------------------------
# Pallas matmul kernels (fused BN scale/shift + activation epilogue)
# ----------------------------------------------------------------------------
def _apply_act(y, act):
    if act == "relu":
        return jnp.maximum(y, 0.0)
    if act == "sigmoid":
        return jax.nn.sigmoid(y)
    return y


def _mm_kernel_single(a_ref, b_ref, s_ref, t_ref, o_ref, *, act):
    # whole K fits in one tile: no accumulator scratch / zero-fill needed
    y = jnp.dot(a_ref[...], b_ref[...], preferred_element_type=jnp.float32)
    y = y * s_ref[...] + t_ref[...]
    o_ref[...] = _apply_act(y, act).astype(o_ref.dtype)


def _mm_kernel_acc(a_ref, b_ref, s_ref, t_ref, o_ref, acc_ref, *, act, k_steps):
    k = pl.program_id(2)

    @pl.when(k == 0)
    def _():
        acc_ref[...] = jnp.zeros_like(acc_ref)

    acc_ref[...] += jnp.dot(a_ref[...], b_ref[...],
                            preferred_element_type=jnp.float32)

    @pl.when(k == k_steps - 1)
    def _():
        y = acc_ref[...] * s_ref[...] + t_ref[...]
        o_ref[...] = _apply_act(y, act).astype(o_ref.dtype)


def matmul_scale_shift(a, b, scale, shift, act="none"):
    """(M,Kp) bf16 @ (Kp,Np) bf16 -> f32, then per-column y*scale+shift + act.

    Kp and Np are already multiples of 128 (prepared at init / inside im2col).
    Returns (M, Np) float32; the caller slices off padded output columns.
    """
    M, Kp = a.shape
    Kp2, Np = b.shape
    assert Kp == Kp2 and Kp % 128 == 0 and Np % 128 == 0

    tm = min(256, _round_up(M, 8))
    Mp = _round_up(M, tm)
    if Mp != M:
        a = jnp.pad(a, ((0, Mp - M), (0, 0)))
    # small-M deep layers: shard N finer so the parallel grid has >= 2 tiles
    # (keeps both v7x TensorCores busy); otherwise use 256-wide output tiles.
    tn = 128 if (M <= 64 or Np % 256 != 0) else 256
    # largest k-tile (multiple of 128, <= 512) that divides Kp exactly:
    # no grid step ever multiplies pure zero padding.
    tk = next(c for c in (512, 384, 256, 128) if Kp % c == 0)
    k_steps = Kp // tk

    s2 = scale.reshape(1, Np).astype(jnp.float32)
    t2 = shift.reshape(1, Np).astype(jnp.float32)

    if k_steps == 1:
        kernel = functools.partial(_mm_kernel_single, act=act)
        grid_spec = pltpu.PrefetchScalarGridSpec(
            num_scalar_prefetch=0,
            grid=(Mp // tm, Np // tn),
            in_specs=[
                pl.BlockSpec((tm, tk), lambda i, j: (i, 0)),
                pl.BlockSpec((tk, tn), lambda i, j: (0, j)),
                pl.BlockSpec((1, tn), lambda i, j: (0, j)),
                pl.BlockSpec((1, tn), lambda i, j: (0, j)),
            ],
            out_specs=pl.BlockSpec((tm, tn), lambda i, j: (i, j)),
        )
        dims = ("parallel", "parallel")
    else:
        kernel = functools.partial(_mm_kernel_acc, act=act, k_steps=k_steps)
        grid_spec = pltpu.PrefetchScalarGridSpec(
            num_scalar_prefetch=0,
            grid=(Mp // tm, Np // tn, k_steps),
            in_specs=[
                pl.BlockSpec((tm, tk), lambda i, j, k: (i, k)),
                pl.BlockSpec((tk, tn), lambda i, j, k: (k, j)),
                pl.BlockSpec((1, tn), lambda i, j, k: (0, j)),
                pl.BlockSpec((1, tn), lambda i, j, k: (0, j)),
            ],
            out_specs=pl.BlockSpec((tm, tn), lambda i, j, k: (i, j)),
            scratch_shapes=[pltpu.VMEM((tm, tn), jnp.float32)],
        )
        dims = ("parallel", "parallel", "arbitrary")

    out = pl.pallas_call(
        kernel,
        out_shape=jax.ShapeDtypeStruct((Mp, Np), jnp.float32),
        grid_spec=grid_spec,
        compiler_params=pltpu.CompilerParams(dimension_semantics=dims),
    )(a, b, s2, t2)
    return out[:M]


# ----------------------------------------------------------------------------
# Elementwise Pallas kernels (residual add+relu, cross-modal gating)
# ----------------------------------------------------------------------------
def _elt_kernel(a_ref, b_ref, o_ref, *, op):
    a = a_ref[...]
    b = b_ref[...]
    if op == "add":
        y = a + b
    elif op == "add_relu":
        y = jnp.maximum(a + b, 0.0)
    elif op == "gate":            # a + a * sigmoid_gate(b)
        y = a + a * b
    else:
        raise ValueError(op)
    o_ref[...] = y


_ELT_LANE = 512


@functools.partial(jax.jit, static_argnames=("op",))
def eltwise2(a, b, op):
    """Elementwise op on lane-dense (rows, 512) tiles with a 1-D parallel grid."""
    shape = a.shape
    total = a.size
    rows = pl.cdiv(total, _ELT_LANE)
    tile_r = min(256, _round_up(rows, 8))
    rows_p = _round_up(rows, tile_r)
    pad = rows_p * _ELT_LANE - total
    a2 = jnp.pad(a.reshape(-1), (0, pad)).reshape(rows_p, _ELT_LANE)
    b2 = jnp.pad(b.reshape(-1), (0, pad)).reshape(rows_p, _ELT_LANE)
    out = pl.pallas_call(
        functools.partial(_elt_kernel, op=op),
        out_shape=jax.ShapeDtypeStruct((rows_p, _ELT_LANE), a.dtype),
        grid_spec=pltpu.PrefetchScalarGridSpec(
            num_scalar_prefetch=0,
            grid=(rows_p // tile_r,),
            in_specs=[pl.BlockSpec((tile_r, _ELT_LANE), lambda i: (i, 0)),
                      pl.BlockSpec((tile_r, _ELT_LANE), lambda i: (i, 0))],
            out_specs=pl.BlockSpec((tile_r, _ELT_LANE), lambda i: (i, 0)),
        ),
        compiler_params=pltpu.CompilerParams(dimension_semantics=("parallel",)),
    )(a2, b2)
    return out.reshape(-1)[:total].reshape(shape)


# ----------------------------------------------------------------------------
# MaxPool (plain JAX strided-slice max tree, per performance review)
# ----------------------------------------------------------------------------
@jax.jit
def maxpool3x3_s2_p1(x):
    # TODO(synk): kept in plain JAX (review-approved) — a Pallas window-max
    # would need strided lane access; XLA fuses this into a single pass.
    B, H, W, C = x.shape
    OH = (H + 2 - 3) // 2 + 1
    OW = (W + 2 - 3) // 2 + 1
    neg = jnp.finfo(x.dtype).min
    xp = jnp.pad(x, ((0, 0), (1, 1), (1, 1), (0, 0)), constant_values=neg)
    out = None
    for kh in range(3):
        for kw in range(3):
            s = xp[:, kh:kh + 2 * (OH - 1) + 1:2,
                      kw:kw + 2 * (OW - 1) + 1:2, :]
            out = s if out is None else jnp.maximum(out, s)
    return out


# ----------------------------------------------------------------------------
# Conv / deconv wrappers (im2col glue jitted together with the Pallas matmul)
# ----------------------------------------------------------------------------
def _im2col_bf16(x, kh, kw, stride, pad, k_cols):
    """Extract conv patches in bf16, padded along K to k_cols in one concat."""
    ph_lo, ph_hi, pw_lo, pw_hi = pad
    xb = x.astype(jnp.bfloat16)
    xp = jnp.pad(xb, ((0, 0), (ph_lo, ph_hi), (pw_lo, pw_hi), (0, 0)))
    B, Hp, Wp, Cin = xp.shape
    OH = (Hp - kh) // stride + 1
    OW = (Wp - kw) // stride + 1
    cols = [
        xp[:, i:i + (OH - 1) * stride + 1:stride,
              j:j + (OW - 1) * stride + 1:stride, :]
        for i in range(kh) for j in range(kw)
    ]
    K = kh * kw * Cin
    if k_cols > K:
        cols.append(jnp.zeros((B, OH, OW, k_cols - K), jnp.bfloat16))
    patches = jnp.concatenate(cols, axis=-1).reshape(B * OH * OW, k_cols)
    return patches, OH, OW


@functools.partial(jax.jit,
                   static_argnames=("kh", "kw", "stride", "pad", "act", "n_out"))
def _conv_impl(x, wm, scale, shift, *, kh, kw, stride, pad, act, n_out):
    B = x.shape[0]
    patches, OH, OW = _im2col_bf16(x, kh, kw, stride, pad, wm.shape[0])
    y = matmul_scale_shift(patches, wm, scale, shift, act)
    # keep this slice: padded output columns carry sigmoid(0)=0.5 etc.
    return y[:, :n_out].reshape(B, OH, OW, n_out)


def conv_fwd(x, cp, stride=1, padding=0, act="none"):
    pad = (padding, padding, padding, padding)
    return _conv_impl(x, cp["wm"], cp["scale"], cp["shift"],
                      kh=cp["kh"], kw=cp["kw"], stride=stride, pad=pad,
                      act=act, n_out=cp["cout"])


@functools.partial(jax.jit, static_argnames=("cfg", "act", "n_out"))
def _deconv_impl(x, wms, scale, shift, *, cfg, act, n_out):
    """ConvTranspose2d via sub-pixel (stride^2 phase) decomposition."""
    stride, padding, out_pad, KH, KW, phase_cfg = cfg
    B, H, W, _ = x.shape
    OH = (H - 1) * stride - 2 * padding + KH + out_pad
    OW = (W - 1) * stride - 2 * padding + KW + out_pad
    s = stride
    phase_out = [[None] * s for _ in range(s)]
    sizes = set()
    for wm, (th, tw, dmax_y, dmax_x, ry, rx) in zip(wms, phase_cfg):
        OHr = (OH - ry + s - 1) // s
        OWr = (OW - rx + s - 1) // s
        ph_hi = OHr - 1 + th - H - dmax_y
        pw_hi = OWr - 1 + tw - W - dmax_x
        assert ph_hi >= 0 and pw_hi >= 0
        patches, _, _ = _im2col_bf16(x, th, tw, 1,
                                     (dmax_y, ph_hi, dmax_x, pw_hi),
                                     wm.shape[0])
        y = matmul_scale_shift(patches, wm, scale, shift, act)
        phase_out[ry][rx] = y[:, :n_out].reshape(B, OHr, OWr, n_out)
        sizes.add((OHr, OWr))
    if len(sizes) == 1 and OH % s == 0 and OW % s == 0:
        OHr, OWr = sizes.pop()
        stk = jnp.stack([jnp.stack(row, axis=0) for row in phase_out], axis=0)
        out = jnp.transpose(stk, (2, 3, 0, 4, 1, 5)).reshape(
            B, OHr * s, OWr * s, n_out)
    else:
        out = jnp.zeros((B, OH, OW, n_out), jnp.float32)
        for ry in range(s):
            for rx in range(s):
                out = out.at[:, ry::s, rx::s, :].set(phase_out[ry][rx])
    return out


def deconv_fwd(x, dp, act="none"):
    return _deconv_impl(x, dp["wms"], dp["scale"], dp["shift"],
                        cfg=dp["cfg"], act=act, n_out=dp["cout"])


# ----------------------------------------------------------------------------
# Parameter preparation (fold BN, reshape / pad / bf16-cast weights once)
# ----------------------------------------------------------------------------
def _fold_bn(cout, bias, bn, eps=1e-5):
    if bn is not None:
        gamma, beta, mean, var = bn
        scale = gamma / jnp.sqrt(var + eps)
        shift = beta - mean * scale
        if bias is not None:
            shift = shift + bias * scale
    else:
        scale = jnp.ones((cout,), jnp.float32)
        shift = bias if bias is not None else jnp.zeros((cout,), jnp.float32)
    return scale.astype(jnp.float32), shift.astype(jnp.float32)


def prep_conv(conv, bn=None):
    w = conv["w"]                      # HWIO
    KH, KW, Cin, Cout = w.shape
    scale, shift = _fold_bn(Cout, conv["b"], bn)
    K = KH * KW * Cin
    Kp, Np = _round_up(K, 128), _round_up(Cout, 128)
    wm = jnp.pad(w.reshape(K, Cout).astype(jnp.bfloat16),
                 ((0, Kp - K), (0, Np - Cout)))
    return {"wm": wm,
            "scale": jnp.pad(scale, (0, Np - Cout)),
            "shift": jnp.pad(shift, (0, Np - Cout)),
            "kh": KH, "kw": KW, "cout": Cout}


def _phase_taps(K, s, p, r):
    # output index oy = s*q + r gets contributions x[q-d]*w[s*d+r+p]
    d_min = -((r + p) // s)
    d_max = (K - 1 - r - p) // s
    taps = [s * (d_max - t) + r + p for t in range(d_max - d_min + 1)]
    return taps, d_max


def prep_deconv(convT, bn, *, stride, padding, output_padding):
    w = convT["w"]                     # (Cin, Cout, KH, KW), PyTorch layout
    Cin, Cout, KH, KW = w.shape
    scale, shift = _fold_bn(Cout, convT["b"], bn)
    Np = _round_up(Cout, 128)
    wms, phase_cfg = [], []
    for ry in range(stride):
        kys, dmax_y = _phase_taps(KH, stride, padding, ry)
        for rx in range(stride):
            kxs, dmax_x = _phase_taps(KW, stride, padding, rx)
            w_sub = w[:, :, kys, :][:, :, :, kxs]          # (Cin,Cout,TH,TW)
            w_hwio = jnp.transpose(w_sub, (2, 3, 0, 1))    # (TH,TW,Cin,Cout)
            K = len(kys) * len(kxs) * Cin
            Kp = _round_up(K, 128)
            wm = jnp.pad(w_hwio.reshape(K, Cout).astype(jnp.bfloat16),
                         ((0, Kp - K), (0, Np - Cout)))
            wms.append(wm)
            phase_cfg.append((len(kys), len(kxs), dmax_y, dmax_x, ry, rx))
    return {"wms": tuple(wms),
            "scale": jnp.pad(scale, (0, Np - Cout)),
            "shift": jnp.pad(shift, (0, Np - Cout)),
            "cout": Cout,
            "cfg": (stride, padding, output_padding, KH, KW, tuple(phase_cfg))}


# ----------------------------------------------------------------------------
# Deterministic synthetic parameter init
# ----------------------------------------------------------------------------
class PInit:
    def __init__(self, key):
        self.key = key
        self.i = 0

    def _next(self):
        self.i += 1
        return jax.random.fold_in(self.key, self.i)

    def conv(self, kh, kw, cin, cout, bias=True):
        fan_in = kh * kw * cin
        w = jax.random.normal(self._next(), (kh, kw, cin, cout),
                              jnp.float32) * math.sqrt(2.0 / fan_in)
        b = (0.01 * jax.random.normal(self._next(), (cout,), jnp.float32)
             if bias else None)
        return {"w": w, "b": b}

    def convT(self, cin, cout, k, bias=True):
        fan_in = k * k * cin
        w = jax.random.normal(self._next(), (cin, cout, k, k),
                              jnp.float32) * math.sqrt(2.0 / fan_in)
        b = (0.01 * jax.random.normal(self._next(), (cout,), jnp.float32)
             if bias else None)
        return {"w": w, "b": b}

    def bn(self, c):
        gamma = 1.0 + 0.1 * jax.random.normal(self._next(), (c,), jnp.float32)
        beta = 0.05 * jax.random.normal(self._next(), (c,), jnp.float32)
        mean = 0.05 * jax.random.normal(self._next(), (c,), jnp.float32)
        var = jnp.abs(1.0 + 0.1 * jax.random.normal(self._next(), (c,),
                                                    jnp.float32))
        return (gamma, beta, mean, var)


def make_basic_block(P, cin, cout, stride):
    blk = {"conv1": prep_conv(P.conv(3, 3, cin, cout, bias=False), P.bn(cout)),
           "conv2": prep_conv(P.conv(3, 3, cout, cout, bias=False), P.bn(cout)),
           "down": None}
    if stride != 1 or cin != cout:
        blk["down"] = prep_conv(P.conv(1, 1, cin, cout, bias=False), P.bn(cout))
    return blk


def make_layer(P, cin, cout, nblocks, stride):
    blocks = [make_basic_block(P, cin, cout, stride)]
    for _ in range(nblocks - 1):
        blocks.append(make_basic_block(P, cout, cout, 1))
    return blocks


def make_decoder(P, cin, cout):
    mid = cin // 4
    return {"conv1": prep_conv(P.conv(1, 1, cin, mid), P.bn(mid)),
            "deconv2": prep_deconv(P.convT(mid, mid, 3), P.bn(mid),
                                   stride=2, padding=1, output_padding=1),
            "conv3": prep_conv(P.conv(1, 1, mid, cout), P.bn(cout))}


def init_params(key):
    P = PInit(key)
    f = [64, 128, 256, 512]
    params = {}
    for sfx in ("", "_add"):
        params["stem" + sfx] = prep_conv(P.conv(7, 7, 1, f[0]), P.bn(f[0]))
        params["enc1" + sfx] = make_layer(P, f[0], f[0], 3, 1)
        params["enc2" + sfx] = make_layer(P, f[0], f[1], 4, 2)
        params["enc3" + sfx] = make_layer(P, f[1], f[2], 6, 2)
        params["enc4" + sfx] = make_layer(P, f[2], f[3], 3, 2)
    for i, c in enumerate(f, start=1):
        params[f"fuse{i}"] = {"conv_x": prep_conv(P.conv(3, 3, c, c)),
                              "conv_add": prep_conv(P.conv(3, 3, c, c))}
        params[f"conv{i}"] = prep_conv(P.conv(3, 3, 2 * c, c))
    params["dec4"] = make_decoder(P, f[3], f[2])
    params["dec3"] = make_decoder(P, f[2], f[1])
    params["dec2"] = make_decoder(P, f[1], f[0])
    params["dec1"] = make_decoder(P, f[0], f[0])
    params["finaldeconv1"] = prep_deconv(P.convT(f[0], f[0] // 2, 4), None,
                                         stride=2, padding=1, output_padding=0)
    params["finalconv2"] = prep_conv(P.conv(3, 3, f[0] // 2, f[0]))
    params["finalconv"] = prep_conv(P.conv(3, 3, f[0], 1))
    return params


# ----------------------------------------------------------------------------
# Forward pass
# ----------------------------------------------------------------------------
def stem_fwd(x, cp):
    return maxpool3x3_s2_p1(conv_fwd(x, cp, stride=2, padding=3, act="relu"))


def basic_block_fwd(x, blk, stride):
    out = conv_fwd(x, blk["conv1"], stride=stride, padding=1, act="relu")
    out = conv_fwd(out, blk["conv2"], stride=1, padding=1, act="none")
    if blk["down"] is not None:
        idn = conv_fwd(x, blk["down"], stride=stride, padding=0, act="none")
    else:
        idn = x
    return eltwise2(out, idn, "add_relu")


def run_layer(x, layer, first_stride):
    for i, blk in enumerate(layer):
        x = basic_block_fwd(x, blk, first_stride if i == 0 else 1)
    return x


def cross_mod_fwd(x, add, m):
    g_add = conv_fwd(add, m["conv_add"], padding=1, act="sigmoid")
    g_x = conv_fwd(x, m["conv_x"], padding=1, act="sigmoid")
    return eltwise2(x, g_add, "gate"), eltwise2(add, g_x, "gate")


def decoder_fwd(x, d):
    x = conv_fwd(x, d["conv1"], act="relu")
    x = deconv_fwd(x, d["deconv2"], act="relu")
    x = conv_fwd(x, d["conv3"], act="relu")
    return x


def linknet34_fuse_forward(params, inputs_nchw):
    # inputs_nchw: (B, 2, H, W) float32, matching the PyTorch module.
    inputs = jnp.transpose(inputs_nchw, (0, 2, 3, 1))   # -> NHWC
    x = inputs[..., 0:1]
    add = inputs[..., 1:2]

    x = stem_fwd(x, params["stem"])
    add = stem_fwd(add, params["stem_add"])

    # TODO(synk): the two encoder streams still run as separate pallas_calls
    # per layer; batching {x, add} per launch (block-diag weights) is a
    # further win for the tiny-M deep layers.
    x_e1 = run_layer(x, params["enc1"], 1)
    add_e1 = run_layer(add, params["enc1_add"], 1)
    x_e1, add_e1 = cross_mod_fwd(x_e1, add_e1, params["fuse1"])
    x_fuse1 = conv_fwd(jnp.concatenate([x_e1, add_e1], -1),
                       params["conv1"], padding=1)

    x_e2 = run_layer(x_e1, params["enc2"], 2)
    add_e2 = run_layer(add_e1, params["enc2_add"], 2)
    x_e2, add_e2 = cross_mod_fwd(x_e2, add_e2, params["fuse2"])
    x_fuse2 = conv_fwd(jnp.concatenate([x_e2, add_e2], -1),
                       params["conv2"], padding=1)

    x_e3 = run_layer(x_e2, params["enc3"], 2)
    add_e3 = run_layer(add_e2, params["enc3_add"], 2)
    x_e3, add_e3 = cross_mod_fwd(x_e3, add_e3, params["fuse3"])
    x_fuse3 = conv_fwd(jnp.concatenate([x_e3, add_e3], -1),
                       params["conv3"], padding=1)

    x_e4 = run_layer(x_e3, params["enc4"], 2)
    add_e4 = run_layer(add_e3, params["enc4_add"], 2)
    x_e4, add_e4 = cross_mod_fwd(x_e4, add_e4, params["fuse4"])
    x_fuse4 = conv_fwd(jnp.concatenate([x_e4, add_e4], -1),
                       params["conv4"], padding=1)

    x_d4 = eltwise2(decoder_fwd(x_fuse4, params["dec4"]), x_fuse3, "add")
    x_d3 = eltwise2(decoder_fwd(x_d4, params["dec3"]), x_fuse2, "add")
    x_d2 = eltwise2(decoder_fwd(x_d3, params["dec2"]), x_fuse1, "add")
    x_d1 = decoder_fwd(x_d2, params["dec1"])

    x_out = deconv_fwd(x_d1, params["finaldeconv1"], act="relu")
    x_out = conv_fwd(x_out, params["finalconv2"], padding=1, act="relu")
    out = conv_fwd(x_out, params["finalconv"], padding=1, act="sigmoid")
    return jnp.transpose(out, (0, 3, 1, 2))             # -> NCHW (B,1,H,W)


# ----------------------------------------------------------------------------
if __name__ == "__main__":
    key = jax.random.PRNGKey(0)
    pkey, xkey = jax.random.split(key)

    params = init_params(pkey)

    B, H, W = 2, 64, 64
    inputs = jax.random.normal(xkey, (B, 2, H, W), jnp.float32)

    out = linknet34_fuse_forward(params, inputs)
    out = jax.block_until_ready(out)

    assert out.shape == (B, 1, H, W), out.shape
    assert bool(jnp.all(jnp.isfinite(out)))
    assert bool(jnp.all((out >= 0.0) & (out <= 1.0)))
    print("KERNEL_OK")
</pallas_src>

<mosaic_0001>
module attributes {stable_mosaic.version = 11 : i64} {
  func.func @_mm_kernel_single(%arg0: i32, %arg1: i32, %arg2: memref<256x128xbf16, #tpu.memory_space<vmem>>, %arg3: memref<128x128xbf16, #tpu.memory_space<vmem>>, %arg4: memref<1x128xf32, #tpu.memory_space<vmem>>, %arg5: memref<1x128xf32, #tpu.memory_space<vmem>>, %arg6: memref<256x128xf32, #tpu.memory_space<vmem>>) attributes {dimension_semantics = [#tpu.dimension_semantics<parallel>, #tpu.dimension_semantics<parallel>], iteration_bounds = array<i64: 8, 1>, scalar_prefetch = 0 : i64, scratch_operands = 0 : i64, tpu.core_type = #tpu.core_type<tc>, window_params = [{transform_indices = @transform_0, window_bounds = array<i64: 256, 128>}, {transform_indices = @transform_1, window_bounds = array<i64: 128, 128>}, {transform_indices = @transform_2, window_bounds = array<i64: 1, 128>}, {transform_indices = @transform_3, window_bounds = array<i64: 1, 128>}, {transform_indices = @transform_4, window_bounds = array<i64: 256, 128>}]} {
    %c0 = arith.constant 0 : index
    %c0_0 = arith.constant 0 : index
    %0 = vector.load %arg2[%c0, %c0_0] : memref<256x128xbf16, #tpu.memory_space<vmem>>, vector<256x128xbf16>
    %c0_1 = arith.constant 0 : index
    %c0_2 = arith.constant 0 : index
    %1 = vector.load %arg3[%c0_1, %c0_2] : memref<128x128xbf16, #tpu.memory_space<vmem>>, vector<128x128xbf16>
    %cst = arith.constant dense<0.000000e+00> : vector<256x128xf32>
    %2 = tpu.matmul %0, %1, %cst {dimension_numbers = #tpu.dot_dimension_numbers<[1], [0], [0], [1], [0, 0, 1, 1], [], []>} : vector<256x128xbf16>, vector<128x128xbf16>, vector<256x128xf32> -> vector<256x128xf32>
    %c0_3 = arith.constant 0 : index
    %c0_4 = arith.constant 0 : index
    %3 = vector.load %arg4[%c0_3, %c0_4] : memref<1x128xf32, #tpu.memory_space<vmem>>, vector<1x128xf32>
    %4 = vector.broadcast %3 : vector<1x128xf32> to vector<256x128xf32>
    %5 = arith.mulf %2, %4 : vector<256x128xf32>
    %c0_5 = arith.constant 0 : index
    %c0_6 = arith.constant 0 : index
    %6 = vector.load %arg5[%c0_5, %c0_6] : memref<1x128xf32, #tpu.memory_space<vmem>>, vector<1x128xf32>
    %7 = vector.broadcast %6 : vector<1x128xf32> to vector<256x128xf32>
    %8 = arith.addf %5, %7 : vector<256x128xf32>
    %cst_7 = arith.constant 0.000000e+00 : f32
    %9 = vector.broadcast %cst_7 : f32 to vector<256x128xf32>
    %10 = arith.maximumf %8, %9 : vector<256x128xf32>
    %c0_8 = arith.constant 0 : index
    %c0_9 = arith.constant 0 : index
    %11 = vector.load %arg6[%c0_8, %c0_9] : memref<256x128xf32, #tpu.memory_space<vmem>>, vector<256x128xf32>
    tpu.vector_store %arg6[%c0_8, %c0_9], %10 {strides = array<i32>} : memref<256x128xf32, #tpu.memory_space<vmem>>, vector<256x128xf32>,
    return
  }
  func.func @transform_0(%arg0: i32, %arg1: i32) -> (i32, i32) {
    %c0_i32 = arith.constant 0 : i32
    %c0_i32_0 = arith.constant 0 : i32
    return %arg0, %c0_i32 : i32, i32
  }
  func.func @transform_1(%arg0: i32, %arg1: i32) -> (i32, i32) {
    %c0_i32 = arith.constant 0 : i32
    %c0_i32_0 = arith.constant 0 : i32
    return %c0_i32, %arg1 : i32, i32
  }
  func.func @transform_2(%arg0: i32, %arg1: i32) -> (i32, i32) {
    %c0_i32 = arith.constant 0 : i32
    %c0_i32_0 = arith.constant 0 : i32
    return %c0_i32, %arg1 : i32, i32
  }
  func.func @transform_3(%arg0: i32, %arg1: i32) -> (i32, i32) {
    %c0_i32 = arith.constant 0 : i32
    %c0_i32_0 = arith.constant 0 : i32
    return %c0_i32, %arg1 : i32, i32
  }
  func.func @transform_4(%arg0: i32, %arg1: i32) -> (i32, i32) {
    %c0_i32 = arith.constant 0 : i32
    return %arg0, %arg1 : i32, i32
  }
}

</mosaic_0001>

<llo_original>
// kernel: _conv_impl.1
$region0: #{_conv_impl.1}
  #allocation0 [shape = 'u32[]', space=smem, size = 0x4, offset = 0x4, fixed_abs, tag = 'smem constant byte address 0x4 - core index']
  #allocation1 [shape = 'u32[144,128]{1,0:T(1,128)}', space=vmem, size = 0x12000, scoped, tag = 'internal scratch']
  %s0 = inlined_call_operand.vmem [shape: bf16[2048,128], index: 0, kind: input, shape index: {}]
  %s1 = inlined_call_operand.vmem [shape: bf16[128,128], index: 1, kind: input, shape index: {}]
  %s2 = inlined_call_operand.vmem [shape: f32[1,128], index: 2, kind: input, shape index: {}]
  %s3 = inlined_call_operand.vmem [shape: f32[1,128], index: 3, kind: input, shape index: {}]
  %s4 = inlined_call_operand.hbm [shape: f32[2048,128], index: 4, kind: output, shape index: {}]
  %s5 = sld [smem:[#allocation0]]
  $region49: #{_conv_impl.1} parent=0
    _
  %s7 = ssub.s32 1, %s5
  %s8 = scalar_select 0, %s7, %s5
  $region1: #{_conv_impl.1} parent=0
    #allocation2 [shape = 'u8[262144]{0}', space=vmem, size = 0x40000, scoped, tag = 'output window, operand 0']
    #allocation3 [shape = 's32[2]{0}', space=sflag, size = 0x8, scoped, tag = 'scoped memory for _conv_impl.1']
    %9 = vsyncpa [#allocation3], 0
    %s10 = scalar_lea.sflag [#allocation3], 1
    %11 = vsyncpa %s10, 0
    loop: start=0, step=1, limit=10
    $region2: #{_conv_impl.1} parent=1 // loop_pre_header
      _
    $region3: #{_conv_impl.1} parent=1 // loop_header
      %s13 = sphi 0, %s17
      %p14 = scmp.ge.s32.totalorder %s13, 10
      %s20 = sphi 0, %s32
      %s21 = sphi 0, %s28
      %s22 = sphi 0, %s20
      %s23 = sphi 0, %s21
      %s24 = sphi 0, %s22
      %s25 = sphi 0, %s23
      %s35 = sphi 0, %s37
      %s38 = sphi 0, %s35
      %s39 = sphi 0, %s38
      %s55 = sphi 0, %s39
      %s61 = sphi 0, %s63
      %s64 = sphi 0, %s61
      %s65 = sphi 0, %s64
      %s81 = sphi 0, %s65
      %s87 = sphi 0, %s89
      %s90 = sphi 0, %s87
      %s91 = sphi 0, %s90
      %s107 = sphi 0, %s91
      %s113 = sphi 0, %s115
      %s116 = sphi 0, %s113
      %s117 = sphi 0, %s116
      %s133 = sphi 0, %s117
      %s141 = sphi 0, %s143
      %s144 = sphi 0, %s141
      %s145 = sphi 0, %s144
      %s161 = sphi 0, %s145
    $region4: #{_conv_impl.1} parent=1 // loop_header_branch
      %16 = sbr.rel (%p14) target = $region8
    $region5: #{_conv_impl.1} parent=1 // loop_body
      %s18 = ssub.s32 %s13, 1
      %s19 = ssub.s32 %s13, 2
      %s26 = sadd.s32 1, %s21
      %p27 = scmp.ge.s32.totalorder %s26, 1
      %s28 = scalar_select %p27, 0, %s26
      %s29 = sadd.s32 1, %s20
      %s30 = scalar_select %p27, %s29, %s20
      %p31 = scmp.ge.s32.totalorder %s30, 8
      %s32 = scalar_select %p31, 0, %s30
      %s33 = ssub.s32 %s20, %s32
      %p34 = scmp.eq.s32.totalorder %s33, 0
      %s36 = sadd.s32 %s35, 1
      %s37 = scalar_select %p34, %s35, %s36
      %p40 = pneg %p34
      %p41 = scmp.eq.s32.totalorder %s13, 7
      %p42 = por %p40, %p41
      %p43 = scmp.ne.s32.totalorder %s35, %s38
      %p44 = scmp.eq.s32.totalorder %s13, 0
      %p45 = por %p43, %p44
      %p46 = scmp.ne.s32.totalorder %s35, %s38
      %p47 = scmp.eq.s32.totalorder %s18, 7
      %p48 = por %p46, %p47
      %p49 = scmp.ne.s32.totalorder %s38, %s39
      %p50 = scmp.eq.s32.totalorder %s18, 0
      %p51 = por %p49, %p50
      %p52 = scmp.ne.s32.totalorder %s38, %s39
      %p53 = scmp.eq.s32.totalorder %s19, 7
      %p54 = por %p52, %p53
      %p56 = scmp.ne.s32.totalorder %s39, %s55
      %p57 = scmp.eq.s32.totalorder %s19, 0
      %p58 = por %p56, %p57
      %s59 = ssub.s32 %s21, %s28
      %p60 = scmp.eq.s32.totalorder %s59, 0
      %s62 = sadd.s32 %s61, 1
      %s63 = scalar_select %p60, %s61, %s62
      %p66 = pneg %p60
      %p67 = scmp.eq.s32.totalorder %s13, 7
      %p68 = por %p66, %p67
      %p69 = scmp.ne.s32.totalorder %s61, %s64
      %p70 = scmp.eq.s32.totalorder %s13, 0
      %p71 = por %p69, %p70
      %p72 = scmp.ne.s32.totalorder %s61, %s64
      %p73 = scmp.eq.s32.totalorder %s18, 7
      %p74 = por %p72, %p73
      %p75 = scmp.ne.s32.totalorder %s64, %s65
      %p76 = scmp.eq.s32.totalorder %s18, 0
      %p77 = por %p75, %p76
      %p78 = scmp.ne.s32.totalorder %s64, %s65
      %p79 = scmp.eq.s32.totalorder %s19, 7
      %p80 = por %p78, %p79
      %p82 = scmp.ne.s32.totalorder %s65, %s81
      %p83 = scmp.eq.s32.totalorder %s19, 0
      %p84 = por %p82, %p83
      %s85 = ssub.s32 %s21, %s28
      %p86 = scmp.eq.s32.totalorder %s85, 0
      %s88 = sadd.s32 %s87, 1
      %s89 = scalar_select %p86, %s87, %s88
      %p92 = pneg %p86
      %p93 = scmp.eq.s32.totalorder %s13, 7
      %p94 = por %p92, %p93
      %p95 = scmp.ne.s32.totalorder %s87, %s90
      %p96 = scmp.eq.s32.totalorder %s13, 0
      %p97 = por %p95, %p96
      %p98 = scmp.ne.s32.totalorder %s87, %s90
      %p99 = scmp.eq.s32.totalorder %s18, 7
      %p100 = por %p98, %p99
      %p101 = scmp.ne.s32.totalorder %s90, %s91
      %p102 = scmp.eq.s32.totalorder %s18, 0
      %p103 = por %p101, %p102
      %p104 = scmp.ne.s32.totalorder %s90, %s91
      %p105 = scmp.eq.s32.totalorder %s19, 7
      %p106 = por %p104, %p105
      %p108 = scmp.ne.s32.totalorder %s91, %s107
      %p109 = scmp.eq.s32.totalorder %s19, 0
      %p110 = por %p108, %p109
      %s111 = ssub.s32 %s21, %s28
      %p112 = scmp.eq.s32.totalorder %s111, 0
      %s114 = sadd.s32 %s113, 1
      %s115 = scalar_select %p112, %s113, %s114
      %p118 = pneg %p112
      %p119 = scmp.eq.s32.totalorder %s13, 7
      %p120 = por %p118, %p119
      %p121 = scmp.ne.s32.totalorder %s113, %s116
      %p122 = scmp.eq.s32.totalorder %s13, 0
      %p123 = por %p121, %p122
      %p124 = scmp.ne.s32.totalorder %s113, %s116
      %p125 = scmp.eq.s32.totalorder %s18, 7
      %p126 = por %p124, %p125
      %p127 = scmp.ne.s32.totalorder %s116, %s117
      %p128 = scmp.eq.s32.totalorder %s18, 0
      %p129 = por %p127, %p128
      %p130 = scmp.ne.s32.totalorder %s116, %s117
      %p131 = scmp.eq.s32.totalorder %s19, 7
      %p132 = por %p130, %p131
      %p134 = scmp.ne.s32.totalorder %s117, %s133
      %p135 = scmp.eq.s32.totalorder %s19, 0
      %p136 = por %p134, %p135
      %s137 = ssub.s32 %s20, %s32
      %s138 = ssub.s32 %s21, %s28
      %s139 = sor.u32 %s137, %s138
      %p140 = scmp.eq.s32.totalorder %s139, 0
      %s142 = sadd.s32 %s141, 1
      %s143 = scalar_select %p140, %s141, %s142
      %p146 = pneg %p140
      %p147 = scmp.eq.s32.totalorder %s13, 7
      %p148 = por %p146, %p147
      %p149 = scmp.ne.s32.totalorder %s141, %s144
      %p150 = scmp.eq.s32.totalorder %s13, 0
      %p151 = por %p149, %p150
      %p152 = scmp.ne.s32.totalorder %s141, %s144
      %p153 = scmp.eq.s32.totalorder %s18, 7
      %p154 = por %p152, %p153
      %p155 = scmp.ne.s32.totalorder %s144, %s145
      %p156 = scmp.eq.s32.totalorder %s18, 0
      %p157 = por %p155, %p156
      %p158 = scmp.ne.s32.totalorder %s144, %s145
      %p159 = scmp.eq.s32.totalorder %s19, 7
      %p160 = por %p158, %p159
      %p162 = scmp.ne.s32.totalorder %s145, %s161
      %p163 = scmp.eq.s32.totalorder %s19, 0
      %p164 = por %p162, %p163
      %p165 = scmp.le.s32.totalorder 1, %s13
      %p166 = scmp.lt.s32.totalorder %s13, 9
      %p167 = pnand %p165, %p166
      %p168 = pneg %p167
      // Predicated region
      $region9: #{_conv_impl.1} parent=5 // pred_check
        _
      $region10: #{_conv_impl.1} parent=5 // pred_check_branch
        %170 = sbr.rel (%p167) target = $region12
      $region11: #{_conv_impl.1} parent=5 // pred_region
        %s171 = ssub.s32 %s13, 1
        // Predicated region
        $region13: #{_conv_impl.1} parent=11 // pred_check
          %p172 = pneg %p77
        $region14: #{_conv_impl.1} parent=11 // pred_check_branch
          %174 = sbr.rel (%p172) target = $region16
        $region15: #{_conv_impl.1} parent=11 // pred_region
          %p175 = scmp.lt.s32.totalorder %s23, 0
          %s176 = scalar_select %p175, %s23, 0
          %s177 = smul.addr %s176, 4
          %s178 = scalar_lea.vmem %s1, %s177
        $region16: #{_conv_impl.1} parent=11 // pred_fallthru
          _
        // Predicated region
        $region17: #{_conv_impl.1} parent=11 // pred_check
          %p179 = pneg %p103
        $region18: #{_conv_impl.1} parent=11 // pred_check_branch
          %181 = sbr.rel (%p179) target = $region20
        $region19: #{_conv_impl.1} parent=11 // pred_region
          %p182 = scmp.lt.s32.totalorder %s23, 0
          %s183 = scalar_select %p182, %s23, 0
          %s184 = scalar_lea.vmem %s2, %s183
        $region20: #{_conv_impl.1} parent=11 // pred_fallthru
          _
        // Predicated region
        $region21: #{_conv_impl.1} parent=11 // pred_check
          %p185 = pneg %p129
        $region22: #{_conv_impl.1} parent=11 // pred_check_branch
          %187 = sbr.rel (%p185) target = $region24
        $region23: #{_conv_impl.1} parent=11 // pred_region
          %p188 = scmp.lt.s32.totalorder %s23, 0
          %s189 = scalar_select %p188, %s23, 0
          %s190 = scalar_lea.vmem %s3, %s189
        $region24: #{_conv_impl.1} parent=11 // pred_fallthru
          _
      $region12: #{_conv_impl.1} parent=5 // pred_fallthru
        _
      %p191 = scmp.lt.s32.totalorder %s13, 8
      // Predicated region
      $region25: #{_conv_impl.1} parent=5 // pred_check
        %p192 = pneg %p191
      $region26: #{_conv_impl.1} parent=5 // pred_check_branch
        %194 = sbr.rel (%p192) target = $region28
      $region27: #{_conv_impl.1} parent=5 // pred_region
        // Predicated region
        $region29: #{_conv_impl.1} parent=27 // pred_check
          %p195 = pneg %p45
        $region30: #{_conv_impl.1} parent=27 // pred_check_branch
          %197 = sbr.rel (%p195) target = $region32
        $region31: #{_conv_impl.1} parent=27 // pred_region
          %s198 = smul.u32 32, %s20
          %p199 = scmp.lt.s32.totalorder %s198, 255
          %s200 = scalar_select %p199, %s198, 255
          %s201 = smul.addr %s200, 4
          %s202 = scalar_lea.vmem %s0, %s201
          %s203 = smul.u32 32, %s20
        $region32: #{_conv_impl.1} parent=27 // pred_fallthru
          _
      $region28: #{_conv_impl.1} parent=5 // pred_fallthru
        _
      %p204 = scmp.le.s32.totalorder 1, %s13
      %p205 = scmp.lt.s32.totalorder %s13, 9
      %p206 = pnand %p204, %p205
      %p207 = pneg %p206
      // Predicated region
      $region33: #{_conv_impl.1} parent=5 // pred_check
        _
      $region34: #{_conv_impl.1} parent=5 // pred_check_branch
        %209 = sbr.rel (%p206) target = $region36
      $region35: #{_conv_impl.1} parent=5 // pred_region
        %s210 = ssub.s32 %s13, 1
        %s211 = smul.u32 32, %s22
        %p212 = scmp.lt.s32.totalorder %s211, 255
        %s213 = scalar_select %p212, %s211, 255
        %s214 = smul.addr %s213, 4
        %s215 = scalar_lea.vmem %s0, %s214
        %p216 = pneg %p51
        %p217 = pneg %p48
        %p218 = scmp.lt.s32.totalorder %s23, 0
        %s219 = scalar_select %p218, %s23, 0
        %s220 = smul.addr %s219, 4
        %s221 = scalar_lea.vmem %s1, %s220
        %p222 = pneg %p77
        %p223 = pneg %p74
        %p224 = scmp.lt.s32.totalorder %s23, 0
        %s225 = scalar_select %p224, %s23, 0
        %s226 = scalar_lea.vmem %s2, %s225
        %p227 = pneg %p103
        %p228 = pneg %p100
        %p229 = scmp.lt.s32.totalorder %s23, 0
        %s230 = scalar_select %p229, %s23, 0
        %s231 = scalar_lea.vmem %s3, %s230
        %p232 = pneg %p129
        %p233 = pneg %p126
        %p234 = pneg %p157
        %p235 = pneg %p154
        %s236 = sand.u32 %s144, 1
        %s237 = scalar_lea.sflag [#allocation3], %s236
        %s238 = sand.u32 %s144, 1
        %s239 = smul.addr %s238, 256
        %s240 = scalar_lea.vmem [#allocation2], %s239
        %s241 = smul.u32 32, %s22
        %p242 = scmp.lt.s32.totalorder %s241, 255
        %s243 = scalar_select %p242, %s241, 255
        %s244 = smul.addr %s243, 4
        %s245 = scalar_lea.vmem %s0, %s244
        %s246 = smul.u32 32, %s22
        %p247 = scmp.lt.s32.totalorder %s23, 0
        %s248 = scalar_select %p247, %s23, 0
        %s249 = smul.addr %s248, 4
        %s250 = scalar_lea.vmem %s1, %s249
        %p251 = scmp.lt.s32.totalorder %s23, 0
        %s252 = scalar_select %p251, %s23, 0
        %s253 = scalar_lea.vmem %s2, %s252
        %p254 = scmp.lt.s32.totalorder %s23, 0
        %s255 = scalar_select %p254, %s23, 0
        %s256 = scalar_lea.vmem %s3, %s255
        %s257 = smul.u32 32, %s22
        %v259 = vld [vmem:[%s245] sm:$0xf]
        %v260 = vld [vmem:[%s245 + $0x4] sm:$0xf]
        %v261 = vld [vmem:[%s245 + $0x8] sm:$0xf]
        %v262 = vld [vmem:[%s245 + $0xc] sm:$0xf]
        %v263 = vld [vmem:[%s245 + $0x10] sm:$0xf]
        %v264 = vld [vmem:[%s245 + $0x14] sm:$0xf]
        %v265 = vld [vmem:[%s245 + $0x18] sm:$0xf]
        %v266 = vld [vmem:[%s245 + $0x1c] sm:$0xf]
        %v267 = vld [vmem:[%s245 + $0x20] sm:$0xf]
        %v268 = vld [vmem:[%s245 + $0x24] sm:$0xf]
        %v269 = vld [vmem:[%s245 + $0x28] sm:$0xf]
        %v270 = vld [vmem:[%s245 + $0x2c] sm:$0xf]
        %v271 = vld [vmem:[%s245 + $0x30] sm:$0xf]
        %v272 = vld [vmem:[%s245 + $0x34] sm:$0xf]
        %v273 = vld [vmem:[%s245 + $0x38] sm:$0xf]
        %v274 = vld [vmem:[%s245 + $0x3c] sm:$0xf]
        %v275 = vld [vmem:[%s245 + $0x40] sm:$0xf]
        %v276 = vld [vmem:[%s245 + $0x44] sm:$0xf]
        %v277 = vld [vmem:[%s245 + $0x48] sm:$0xf]
        %v278 = vld [vmem:[%s245 + $0x4c] sm:$0xf]
        %v279 = vld [vmem:[%s245 + $0x50] sm:$0xf]
        %v280 = vld [vmem:[%s245 + $0x54] sm:$0xf]
        %v281 = vld [vmem:[%s245 + $0x58] sm:$0xf]
        %v282 = vld [vmem:[%s245 + $0x5c] sm:$0xf]
        %v283 = vld [vmem:[%s245 + $0x60] sm:$0xf]
        %v284 = vld [vmem:[%s245 + $0x64] sm:$0xf]
        %v285 = vld [vmem:[%s245 + $0x68] sm:$0xf]
        %v286 = vld [vmem:[%s245 + $0x6c] sm:$0xf]
        %v287 = vld [vmem:[%s245 + $0x70] sm:$0xf]
        %v288 = vld [vmem:[%s245 + $0x74] sm:$0xf]
        %v289 = vld [vmem:[%s245 + $0x78] sm:$0xf]
        %v290 = vld [vmem:[%s245 + $0x7c] sm:$0xf]
        %v291 = vld [vmem:[%s250] sm:$0xf]
        %v292 = vld [vmem:[%s250 + $0x4] sm:$0xf]
        %v293 = vld [vmem:[%s250 + $0x8] sm:$0xf]
        %v294 = vld [vmem:[%s250 + $0xc] sm:$0xf]
        %v295 = vld [vmem:[%s250 + $0x10] sm:$0xf]
        %v296 = vld [vmem:[%s250 + $0x14] sm:$0xf]
        %v297 = vld [vmem:[%s250 + $0x18] sm:$0xf]
        %v298 = vld [vmem:[%s250 + $0x1c] sm:$0xf]
        %v299 = vld [vmem:[%s250 + $0x20] sm:$0xf]
        %v300 = vld [vmem:[%s250 + $0x24] sm:$0xf]
        %v301 = vld [vmem:[%s250 + $0x28] sm:$0xf]
        %v302 = vld [vmem:[%s250 + $0x2c] sm:$0xf]
        %v303 = vld [vmem:[%s250 + $0x30] sm:$0xf]
        %v304 = vld [vmem:[%s250 + $0x34] sm:$0xf]
        %v305 = vld [vmem:[%s250 + $0x38] sm:$0xf]
        %v306 = vld [vmem:[%s250 + $0x3c] sm:$0xf]
        %v339 = vunpack.c.l.b16 %v259
        %v340 = vunpack.c.l.b16 %v260
        %v341 = vunpack.c.l.b16 %v261
        %v342 = vunpack.c.l.b16 %v262
        %v343 = vunpack.c.l.b16 %v263
        %v344 = vunpack.c.l.b16 %v264
        %v345 = vunpack.c.l.b16 %v265
        %v346 = vunpack.c.l.b16 %v266
        %v347 = vunpack.c.l.b16 %v267
        %v348 = vunpack.c.l.b16 %v268
        %v349 = vunpack.c.l.b16 %v269
        %v350 = vunpack.c.l.b16 %v270
        %v351 = vunpack.c.l.b16 %v271
        %v352 = vunpack.c.l.b16 %v272
        %v353 = vunpack.c.l.b16 %v273
        %v354 = vunpack.c.l.b16 %v274
        %v355 = vunpack.c.l.b16 %v275
        %v356 = vunpack.c.l.b16 %v276
        %v357 = vunpack.c.l.b16 %v277
        %v358 = vunpack.c.l.b16 %v278
        %v359 = vunpack.c.l.b16 %v279
        %v360 = vunpack.c.l.b16 %v280
        %v361 = vunpack.c.l.b16 %v281
        %v362 = vunpack.c.l.b16 %v282
        %v363 = vunpack.c.l.b16 %v283
        %v364 = vunpack.c.l.b16 %v284
        %v365 = vunpack.c.l.b16 %v285
        %v366 = vunpack.c.l.b16 %v286
        %v367 = vunpack.c.l.b16 %v287
        %v368 = vunpack.c.l.b16 %v288
        %v369 = vunpack.c.l.b16 %v289
        %v370 = vunpack.c.l.b16 %v290
        %v371 = vpack.c.b16 %v340, %v339
        %v372 = vpack.c.b16 %v342, %v341
        %v373 = vpack.c.b16 %v344, %v343
        %v374 = vpack.c.b16 %v346, %v345
        %v375 = vpack.c.b16 %v348, %v347
        %v376 = vpack.c.b16 %v350, %v349
        %v377 = vpack.c.b16 %v352, %v351
        %v378 = vpack.c.b16 %v354, %v353
        %v379 = vpack.c.b16 %v356, %v355
        %v380 = vpack.c.b16 %v358, %v357
        %v381 = vpack.c.b16 %v360, %v359
        %v382 = vpack.c.b16 %v362, %v361
        %v383 = vpack.c.b16 %v364, %v363
        %v384 = vpack.c.b16 %v366, %v365
        %v385 = vpack.c.b16 %v368, %v367
        %v386 = vpack.c.b16 %v370, %v369
        %v419 = vunpack.c.l.b16 %v291
        %v420 = vunpack.c.l.b16 %v292
        %v421 = vunpack.c.l.b16 %v293
        %v422 = vunpack.c.l.b16 %v294
        %v423 = vunpack.c.l.b16 %v295
        %v424 = vunpack.c.l.b16 %v296
        %v425 = vunpack.c.l.b16 %v297
        %v426 = vunpack.c.l.b16 %v298
        %v427 = vunpack.c.l.b16 %v299
        %v428 = vunpack.c.l.b16 %v300
        %v429 = vunpack.c.l.b16 %v301
        %v430 = vunpack.c.l.b16 %v302
        %v431 = vunpack.c.l.b16 %v303
        %v432 = vunpack.c.l.b16 %v304
        %v433 = vunpack.c.l.b16 %v305
        %v434 = vunpack.c.l.b16 %v306
        %v435 = vpack.c.b16 %v420, %v419
        %v436 = vpack.c.b16 %v422, %v421
        %v437 = vpack.c.b16 %v424, %v423
        %v438 = vpack.c.b16 %v426, %v425
        %v439 = vpack.c.b16 %v428, %v427
        %v440 = vpack.c.b16 %v430, %v429
        %v441 = vpack.c.b16 %v432, %v431
        %v442 = vpack.c.b16 %v434, %v433
        %451 = vmatprep.subr.bf16.mxu0 0
        %452 = vmatpush1.bf16.msra.mxu0 %v442
        %453 = vmatprep.subr.bf16.mxu0 0
        %454 = vmatpush1.bf16.msra.mxu0 %v441
        %455 = vmatprep.subr.bf16.mxu0 0
        %456 = vmatpush1.bf16.msra.mxu0 %v440
        %457 = vmatprep.subr.bf16.mxu0 0
        %458 = vmatpush1.bf16.msra.mxu0 %v439
        %459 = vmatprep.subr.bf16.mxu0 0
        %460 = vmatpush1.bf16.msra.mxu0 %v438
        %461 = vmatprep.subr.bf16.mxu0 0
        %462 = vmatpush1.bf16.msra.mxu0 %v437
        %463 = vmatprep.subr.bf16.mxu0 0
        %464 = vmatpush1.bf16.msra.mxu0 %v436
        %465 = vmatprep.subr.bf16.mxu0 0
        %466 = vmatpush1.bf16.msra.mxu0 %v435
        %467 = vmatprep.subr.bf16.mxu0 0
        %468 = vmatpush2.bf16.msra.mxu0 0
        %469 = vmatprep.subr.bf16.mxu0 0
        %470 = vmatpush2.bf16.msra.mxu0 0
        %471 = vmatprep.subr.bf16.mxu0 0
        %472 = vmatpush2.bf16.msra.mxu0 0
        %473 = vmatprep.subr.bf16.mxu0 0
        %474 = vmatpush2.bf16.msra.mxu0 0
        %475 = vmatprep.subr.bf16.mxu0 0
        %476 = vmatpush2.bf16.msra.mxu0 0
        %477 = vmatprep.subr.bf16.mxu0 0
        %478 = vmatpush2.bf16.msra.mxu0 0
        %479 = vmatprep.subr.bf16.mxu0 0
        %480 = vmatpush2.bf16.msra.mxu0 0
        %481 = vmatprep.subr.bf16.mxu0 0
        %482 = vmatpush2.bf16.msra.mxu0 0
        %483 = vmatprep.mubr.bf16.mxu0 0
        %484 = vmatmul.mubr.bf16.gmra.mxu0 %v371
        %v485 = vpop.f32.mrf.mxu0
        %v486 = vadd.f32 0.0, %v485
        %v487 = vpop.f32.mrf.mxu0
        %v488 = vpop.f32.mrf.mxu0
        %v489 = vadd.f32 0.0, %v488
        %v490 = vpop.f32.mrf.mxu0
        %491 = vmatprep.mubr.bf16.mxu0 0
        %492 = vmatmul.mubr.bf16.gmra.mxu0 %v372
        %v493 = vpop.f32.mrf.mxu0
        %v494 = vadd.f32 0.0, %v493
        %v495 = vpop.f32.mrf.mxu0
        %v496 = vpop.f32.mrf.mxu0
        %v497 = vadd.f32 0.0, %v496
        %v498 = vpop.f32.mrf.mxu0
        %499 = vmatprep.mubr.bf16.mxu0 0
        %500 = vmatmul.mubr.bf16.gmra.mxu0 %v373
        %v501 = vpop.f32.mrf.mxu0
        %v502 = vadd.f32 0.0, %v501
        %v503 = vpop.f32.mrf.mxu0
        %v504 = vpop.f32.mrf.mxu0
        %v505 = vadd.f32 0.0, %v504
        %v506 = vpop.f32.mrf.mxu0
        %507 = vmatprep.mubr.bf16.mxu0 0
        %508 = vmatmul.mubr.bf16.gmra.mxu0 %v374
        %v509 = vpop.f32.mrf.mxu0
        %v510 = vadd.f32 0.0, %v509
        %v511 = vpop.f32.mrf.mxu0
        %v512 = vpop.f32.mrf.mxu0
        %v513 = vadd.f32 0.0, %v512
        %v514 = vpop.f32.mrf.mxu0
        %515 = vmatprep.mubr.bf16.mxu0 0
        %516 = vmatmul.mubr.bf16.gmra.mxu0 %v375
        %v517 = vpop.f32.mrf.mxu0
        %v518 = vadd.f32 0.0, %v517
        %v519 = vpop.f32.mrf.mxu0
        %v520 = vpop.f32.mrf.mxu0
        %v521 = vadd.f32 0.0, %v520
        %v522 = vpop.f32.mrf.mxu0
        %523 = vmatprep.mubr.bf16.mxu0 0
        %524 = vmatmul.mubr.bf16.gmra.mxu0 %v376
        %v525 = vpop.f32.mrf.mxu0
        %v526 = vadd.f32 0.0, %v525
        %v527 = vpop.f32.mrf.mxu0
        %v528 = vpop.f32.mrf.mxu0
        %v529 = vadd.f32 0.0, %v528
        %v530 = vpop.f32.mrf.mxu0
        %531 = vmatprep.mubr.bf16.mxu0 0
        %532 = vmatmul.mubr.bf16.gmra.mxu0 %v377
        %v533 = vpop.f32.mrf.mxu0
        %v534 = vadd.f32 0.0, %v533
        %v535 = vpop.f32.mrf.mxu0
        %v536 = vpop.f32.mrf.mxu0
        %v537 = vadd.f32 0.0, %v536
        %v538 = vpop.f32.mrf.mxu0
        %539 = vmatprep.mubr.bf16.mxu0 0
        %540 = vmatmul.mubr.bf16.gmra.mxu0 %v378
        %v541 = vpop.f32.mrf.mxu0
        %v542 = vadd.f32 0.0, %v541
        %v543 = vpop.f32.mrf.mxu0
        %v544 = vpop.f32.mrf.mxu0
        %v545 = vadd.f32 0.0, %v544
        %v546 = vpop.f32.mrf.mxu0
        %547 = vmatprep.mubr.bf16.mxu0 0
        %548 = vmatmul.mubr.bf16.gmra.mxu0 %v379
        %v549 = vpop.f32.mrf.mxu0
        %v550 = vadd.f32 0.0, %v549
        %v551 = vpop.f32.mrf.mxu0
        %v552 = vpop.f32.mrf.mxu0
        %v553 = vadd.f32 0.0, %v552
        %v554 = vpop.f32.mrf.mxu0
        %555 = vmatprep.mubr.bf16.mxu0 0
        %556 = vmatmul.mubr.bf16.gmra.mxu0 %v380
        %v557 = vpop.f32.mrf.mxu0
        %v558 = vadd.f32 0.0, %v557
        %v559 = vpop.f32.mrf.mxu0
        %v560 = vpop.f32.mrf.mxu0
        %v561 = vadd.f32 0.0, %v560
        %v562 = vpop.f32.mrf.mxu0
        %563 = vmatprep.mubr.bf16.mxu0 0
        %564 = vmatmul.mubr.bf16.gmra.mxu0 %v381
        %v565 = vpop.f32.mrf.mxu0
        %v566 = vadd.f32 0.0, %v565
        %v567 = vpop.f32.mrf.mxu0
        %v568 = vpop.f32.mrf.mxu0
        %v569 = vadd.f32 0.0, %v568
        %v570 = vpop.f32.mrf.mxu0
        %571 = vmatprep.mubr.bf16.mxu0 0
        %572 = vmatmul.mubr.bf16.gmra.mxu0 %v382
        %v573 = vpop.f32.mrf.mxu0
        %v574 = vadd.f32 0.0, %v573
        %v575 = vpop.f32.mrf.mxu0
        %v576 = vpop.f32.mrf.mxu0
        %v577 = vadd.f32 0.0, %v576
        %v578 = vpop.f32.mrf.mxu0
        %579 = vmatprep.mubr.bf16.mxu0 0
        %580 = vmatmul.mubr.bf16.gmra.mxu0 %v383
        %v581 = vpop.f32.mrf.mxu0
        %v582 = vadd.f32 0.0, %v581
        %v583 = vpop.f32.mrf.mxu0
        %v584 = vpop.f32.mrf.mxu0
        %v585 = vadd.f32 0.0, %v584
        %v586 = vpop.f32.mrf.mxu0
        %587 = vmatprep.mubr.bf16.mxu0 0
        %588 = vmatmul.mubr.bf16.gmra.mxu0 %v384
        %v589 = vpop.f32.mrf.mxu0
        %v590 = vadd.f32 0.0, %v589
        %v591 = vpop.f32.mrf.mxu0
        %v592 = vpop.f32.mrf.mxu0
        %v593 = vadd.f32 0.0, %v592
        %v594 = vpop.f32.mrf.mxu0
        %595 = vmatprep.mubr.bf16.mxu0 0
        %596 = vmatmul.mubr.bf16.gmra.mxu0 %v385
        %v597 = vpop.f32.mrf.mxu0
        %v598 = vadd.f32 0.0, %v597
        %v599 = vpop.f32.mrf.mxu0
        %v600 = vpop.f32.mrf.mxu0
        %v601 = vadd.f32 0.0, %v600
        %v602 = vpop.f32.mrf.mxu0
        %603 = vmatprep.mubr.bf16.mxu0 0
        %604 = vmatmul.mubr.bf16.gmra.mxu0 %v386
        %v605 = vpop.f32.mrf.mxu0
        %v606 = vadd.f32 0.0, %v605
        %v607 = vpop.f32.mrf.mxu0
        %v608 = vpop.f32.mrf.mxu0
        %v609 = vadd.f32 0.0, %v608
        %v610 = vpop.f32.mrf.mxu0
        %611 = vdwg.mxu0
        %v612 = vld [vmem:[%s253] sm:$0x1]
        %v614 = vlaneseq
        %v615 = vshrl.u32 %v614, 7
        %v616 = vsub.s32 0, %v615
        %v617 = vrot.slane %v612, %v616
        %v619 = vmul.f32 %v486, %v617
        %v620 = vmul.f32 %v489, %v617
        %v621 = vmul.f32 %v494, %v617
        %v622 = vmul.f32 %v497, %v617
        %v623 = vmul.f32 %v502, %v617
        %v624 = vmul.f32 %v505, %v617
        %v625 = vmul.f32 %v510, %v617
        %v626 = vmul.f32 %v513, %v617
        %v627 = vmul.f32 %v518, %v617
        %v628 = vmul.f32 %v521, %v617
        %v629 = vmul.f32 %v526, %v617
        %v630 = vmul.f32 %v529, %v617
        %v631 = vmul.f32 %v534, %v617
        %v632 = vmul.f32 %v537, %v617
        %v633 = vmul.f32 %v542, %v617
        %v634 = vmul.f32 %v545, %v617
        %v635 = vmul.f32 %v550, %v617
        %v636 = vmul.f32 %v553, %v617
        %v637 = vmul.f32 %v558, %v617
        %v638 = vmul.f32 %v561, %v617
        %v639 = vmul.f32 %v566, %v617
        %v640 = vmul.f32 %v569, %v617
        %v641 = vmul.f32 %v574, %v617
        %v642 = vmul.f32 %v577, %v617
        %v643 = vmul.f32 %v582, %v617
        %v644 = vmul.f32 %v585, %v617
        %v645 = vmul.f32 %v590, %v617
        %v646 = vmul.f32 %v593, %v617
        %v647 = vmul.f32 %v598, %v617
        %v648 = vmul.f32 %v601, %v617
        %v649 = vmul.f32 %v606, %v617
        %v650 = vmul.f32 %v609, %v617
        %v651 = vld [vmem:[%s256] sm:$0x1]
        %v653 = vlaneseq
        %v654 = vshrl.u32 %v653, 7
        %v655 = vsub.s32 0, %v654
        %v656 = vrot.slane %v651, %v655
        %v658 = vadd.f32 %v619, %v656
        %v659 = vadd.f32 %v620, %v656
        %v660 = vadd.f32 %v621, %v656
        %v661 = vadd.f32 %v622, %v656
        %v662 = vadd.f32 %v623, %v656
        %v663 = vadd.f32 %v624, %v656
        %v664 = vadd.f32 %v625, %v656
        %v665 = vadd.f32 %v626, %v656
        %v666 = vadd.f32 %v627, %v656
        %v667 = vadd.f32 %v628, %v656
        %v668 = vadd.f32 %v629, %v656
        %v669 = vadd.f32 %v630, %v656
        %v670 = vadd.f32 %v631, %v656
        %v671 = vadd.f32 %v632, %v656
        %v672 = vadd.f32 %v633, %v656
        %v673 = vadd.f32 %v634, %v656
        %v674 = vadd.f32 %v635, %v656
        %v675 = vadd.f32 %v636, %v656
        %v676 = vadd.f32 %v637, %v656
        %v677 = vadd.f32 %v638, %v656
        %v678 = vadd.f32 %v639, %v656
        %v679 = vadd.f32 %v640, %v656
        %v680 = vadd.f32 %v641, %v656
        %v681 = vadd.f32 %v642, %v656
        %v682 = vadd.f32 %v643, %v656
        %v683 = vadd.f32 %v644, %v656
        %v684 = vadd.f32 %v645, %v656
        %v685 = vadd.f32 %v646, %v656
        %v686 = vadd.f32 %v647, %v656
        %v687 = vadd.f32 %v648, %v656
        %v688 = vadd.f32 %v649, %v656
        %v689 = vadd.f32 %v650, %v656
        %v690 = vmax.f32 %v658, 0.0
        %v691 = vmax.f32 %v659, 0.0
        %v692 = vmax.f32 %v660, 0.0
        %v693 = vmax.f32 %v661, 0.0
        %v694 = vmax.f32 %v662, 0.0
        %v695 = vmax.f32 %v663, 0.0
        %v696 = vmax.f32 %v664, 0.0
        %v697 = vmax.f32 %v665, 0.0
        %v698 = vmax.f32 %v666, 0.0
        %v699 = vmax.f32 %v667, 0.0
        %v700 = vmax.f32 %v668, 0.0
        %v701 = vmax.f32 %v669, 0.0
        %v702 = vmax.f32 %v670, 0.0
        %v703 = vmax.f32 %v671, 0.0
        %v704 = vmax.f32 %v672, 0.0
        %v705 = vmax.f32 %v673, 0.0
        %v706 = vmax.f32 %v674, 0.0
        %v707 = vmax.f32 %v675, 0.0
        %v708 = vmax.f32 %v676, 0.0
        %v709 = vmax.f32 %v677, 0.0
        %v710 = vmax.f32 %v678, 0.0
        %v711 = vmax.f32 %v679, 0.0
        %v712 = vmax.f32 %v680, 0.0
        %v713 = vmax.f32 %v681, 0.0
        %v714 = vmax.f32 %v682, 0.0
        %v715 = vmax.f32 %v683, 0.0
        %v716 = vmax.f32 %v684, 0.0
        %v717 = vmax.f32 %v685, 0.0
        %v718 = vmax.f32 %v686, 0.0
        %v719 = vmax.f32 %v687, 0.0
        %v720 = vmax.f32 %v688, 0.0
        %v721 = vmax.f32 %v689, 0.0
        %722 = vst [vmem:[%s240] sm:$0xff] %v690
        %723 = vst [vmem:[%s240 + $0x8] sm:$0xff] %v691
        %724 = vst [vmem:[%s240 + $0x10] sm:$0xff] %v692
        %725 = vst [vmem:[%s240 + $0x18] sm:$0xff] %v693
        %726 = vst [vmem:[%s240 + $0x20] sm:$0xff] %v694
        %727 = vst [vmem:[%s240 + $0x28] sm:$0xff] %v695
        %728 = vst [vmem:[%s240 + $0x30] sm:$0xff] %v696
        %729 = vst [vmem:[%s240 + $0x38] sm:$0xff] %v697
        %730 = vst [vmem:[%s240 + $0x40] sm:$0xff] %v698
        %731 = vst [vmem:[%s240 + $0x48] sm:$0xff] %v699
        %732 = vst [vmem:[%s240 + $0x50] sm:$0xff] %v700
        %733 = vst [vmem:[%s240 + $0x58] sm:$0xff] %v701
        %734 = vst [vmem:[%s240 + $0x60] sm:$0xff] %v702
        %735 = vst [vmem:[%s240 + $0x68] sm:$0xff] %v703
        %736 = vst [vmem:[%s240 + $0x70] sm:$0xff] %v704
        %737 = vst [vmem:[%s240 + $0x78] sm:$0xff] %v705
        %738 = vst [vmem:[%s240 + $0x80] sm:$0xff] %v706
        %739 = vst [vmem:[%s240 + $0x88] sm:$0xff] %v707
        %740 = vst [vmem:[%s240 + $0x90] sm:$0xff] %v708
        %741 = vst [vmem:[%s240 + $0x98] sm:$0xff] %v709
        %742 = vst [vmem:[%s240 + $0xa0] sm:$0xff] %v710
        %743 = vst [vmem:[%s240 + $0xa8] sm:$0xff] %v711
        %744 = vst [vmem:[%s240 + $0xb0] sm:$0xff] %v712
        %745 = vst [vmem:[%s240 + $0xb8] sm:$0xff] %v713
        %746 = vst [vmem:[%s240 + $0xc0] sm:$0xff] %v714
        %747 = vst [vmem:[%s240 + $0xc8] sm:$0xff] %v715
        %748 = vst [vmem:[%s240 + $0xd0] sm:$0xff] %v716
        %749 = vst [vmem:[%s240 + $0xd8] sm:$0xff] %v717
        %750 = vst [vmem:[%s240 + $0xe0] sm:$0xff] %v718
        %751 = vst [vmem:[%s240 + $0xe8] sm:$0xff] %v719
        %752 = vst [vmem:[%s240 + $0xf0] sm:$0xff] %v720
        %753 = vst [vmem:[%s240 + $0xf8] sm:$0xff] %v721
        %s754 = sand.u32 %s144, 1
        %s755 = scalar_lea.sflag [#allocation3], %s754
        %s756 = sand.u32 %s144, 1
        %s757 = smul.addr %s756, 256
        %s758 = scalar_lea.vmem [#allocation2], %s757
        // Predicated region
        $region37: #{_conv_impl.1} parent=35 // pred_check
          %p759 = pneg %p154
        $region38: #{_conv_impl.1} parent=35 // pred_check_branch
          %761 = sbr.rel (%p759) target = $region40
        $region39: #{_conv_impl.1} parent=35 // pred_region
          %s762 = smul.u32 32, %s22
          %s764 = ssub.s32 4096, 4096
          %765 = vsyncadd %s755, %s764
          %s766 = sadd.s32 %s23, %s762
          %s767 = smul.addr %s766, 128
          %s768 = scalar_lea.hbm %s4, %s767
          %s769 = sshll.u32 %s758, 4
          %s770 = int_to_ptr.vmem [resolvable:$true] %s769
          %775 = dma.vmem_to_hbm [thread:$0]  %s770, 4096, %s768, %s755, 128, 128, 8
        $region40: #{_conv_impl.1} parent=35 // pred_fallthru
          _
      $region36: #{_conv_impl.1} parent=5 // pred_fallthru
        _
      %p776 = scmp.le.s32.totalorder 2, %s13
      // Predicated region
      $region41: #{_conv_impl.1} parent=5 // pred_check
        %p777 = pneg %p776
      $region42: #{_conv_impl.1} parent=5 // pred_check_branch
        %779 = sbr.rel (%p777) target = $region44
      $region43: #{_conv_impl.1} parent=5 // pred_region
        %s780 = ssub.s32 %s13, 2
        // Predicated region
        $region45: #{_conv_impl.1} parent=43 // pred_check
          %p781 = pneg %p160
        $region46: #{_conv_impl.1} parent=43 // pred_check_branch
          %783 = sbr.rel (%p781) target = $region48
        $region47: #{_conv_impl.1} parent=43 // pred_region
          %s784 = sand.u32 %s145, 1
          %s785 = scalar_lea.sflag [#allocation3], %s784
          %s786 = sand.u32 %s145, 1
          %s787 = smul.addr %s786, 256
          %s788 = scalar_lea.vmem [#allocation2], %s787
          %789 = dma.done %s785, 4096
        $region48: #{_conv_impl.1} parent=43 // pred_fallthru
          _
      $region44: #{_conv_impl.1} parent=5 // pred_fallthru
        _
    $region6: #{_conv_impl.1} parent=1 // loop_footer
      %s17 = sadd.s32 1, %s13
    $region7: #{_conv_impl.1} parent=1 // loop_footer_branch
      %12 = sbr.rel target = $region3
    $region8: #{_conv_impl.1} parent=1 // loop_exit
      _
    %790 = vsyncpa [#allocation3], 1
    %s791 = scalar_lea.sflag [#allocation3], 1
    %792 = vsyncpa %s791, 1

</llo_original>
